<compile_context>
chip_gen: v7x
topology: tpu7x:2x2x1
jax: 0.10.0
libtpu: 0.0.40
codegen_flags: <defaults>
</compile_context>

<pallas_src>
import functools

import numpy as np
import jax
import jax.numpy as jnp
from jax import lax
from jax.experimental import pallas as pl
from jax.experimental.pallas import tpu as pltpu


# ----------------------------------------------------------------------------
# Fused kernel: relu(x @ W + b) -> node embeddings -> gumbel adjacency
# ----------------------------------------------------------------------------
def _state_to_graph_kernel(x_ref, w_ref, b_ref, g_ref, emb_ref, adj_ref, *,
                           num_nodes, node_dim, threshold, temperature, hard,
                           bf16_matmul):
    n, d = num_nodes, node_dim

    # ---- fc1 + ReLU (MXU matmul, f32 accumulation) -------------------------
    x = x_ref[...]
    w = w_ref[...]
    if bf16_matmul:
        x = x.astype(jnp.bfloat16)
        w = w.astype(jnp.bfloat16)
    h = jnp.dot(x, w, preferred_element_type=jnp.float32)
    h = jnp.maximum(h + b_ref[...], 0.0)                     # (tb, N*D) f32
    emb_ref[...] = h.astype(emb_ref.dtype)                   # lane-dense store

    tb = h.shape[0]
    emb = h.reshape(tb, n, d)                                # free view, H = N*D
    emb_mm = emb.astype(jnp.bfloat16) if bf16_matmul else emb

    # ---- cosine-style similarity -------------------------------------------
    # <e_i, e_j> / (||e_i|| * ||e_j|| + 1e-8), matching the torch reference.
    gram = jnp.einsum('bnd,bmd->bnm', emb_mm, emb_mm,
                      preferred_element_type=jnp.float32)    # (tb, n, n)
    sq = jnp.sum(emb * emb, axis=-1)                         # (tb, n)
    norm = jnp.sqrt(sq)
    # Outer product via broadcasting (no K=1 MXU pass).
    denom = norm[:, :, None] * norm[:, None, :] + 1e-8
    sim = jax.nn.sigmoid(gram / denom)
    logits = sim - threshold

    # ---- gumbel-softmax along the last dim ---------------------------------
    # g_ref holds standard Gumbel(0,1) noise drawn outside the kernel.
    z = (logits + g_ref[...].reshape(tb, n, n)) * (1.0 / temperature)
    z = z - jnp.max(z, axis=-1, keepdims=True)
    ez = jnp.exp(z)
    # NOTE: pl.reciprocal(..., approx=True) would push this divide to the EUP
    # on real hardware; plain divide kept for interpreter portability.
    y = ez / jnp.sum(ez, axis=-1, keepdims=True)

    col = lax.broadcasted_iota(jnp.int32, y.shape, 2)
    if hard:
        # Straight-through hard one-hot: forward value is the one-hot at the
        # first argmax column (matches torch.max tie behavior).
        m = jnp.max(y, axis=-1, keepdims=True)
        first = jnp.min(jnp.where(y >= m, col, n), axis=-1, keepdims=True)
        y = jnp.where(col == first, 1.0, 0.0)

    # Zero the diagonal AFTER gumbel-softmax (same ordering as the reference).
    row = lax.broadcasted_iota(jnp.int32, y.shape, 1)
    y = jnp.where(row == col, 0.0, y)
    adj_ref[...] = y.reshape(tb, n * n).astype(adj_ref.dtype)  # lane-dense store


def _pick_batch_tile(batch):
    # Sublane rule: block's second-minor dim must be a multiple of 8 or equal
    # to the full dim.  Small / ragged batches -> single block over the batch.
    if batch >= 8 and batch % 8 == 0:
        tb = 8
        for cand in (16, 32, 64, 128, 256):
            if cand <= batch and batch % cand == 0:
                tb = cand
        return tb
    return batch


def state_to_graph_fused(x, w, b, gumbel_noise, num_nodes, node_dim,
                         similarity_threshold, temperature, hard,
                         bf16_matmul=True):
    B, S = x.shape
    H = w.shape[1]
    NN = num_nodes * num_nodes
    tb = _pick_batch_tile(B)
    grid = (B // tb,)

    kernel = functools.partial(
        _state_to_graph_kernel,
        num_nodes=num_nodes, node_dim=node_dim,
        threshold=float(similarity_threshold),
        temperature=float(temperature),
        hard=bool(hard), bf16_matmul=bool(bf16_matmul))

    emb_flat, adj_flat = pl.pallas_call(
        kernel,
        out_shape=(jax.ShapeDtypeStruct((B, H), jnp.float32),
                   jax.ShapeDtypeStruct((B, NN), jnp.float32)),
        grid=grid,
        in_specs=[
            pl.BlockSpec((tb, S), lambda i: (i, 0)),   # x
            pl.BlockSpec((S, H), lambda i: (0, 0)),    # fc1 weight (S, H)
            pl.BlockSpec((1, H), lambda i: (0, 0)),    # fc1 bias
            pl.BlockSpec((tb, NN), lambda i: (i, 0)),  # gumbel noise
        ],
        out_specs=(pl.BlockSpec((tb, H), lambda i: (i, 0)),   # node_emb slab
                   pl.BlockSpec((tb, NN), lambda i: (i, 0))), # adjacency slab
        compiler_params=pltpu.CompilerParams(
            dimension_semantics=("parallel",)),
    )(x, w, b, gumbel_noise)
    return emb_flat, adj_flat


# ----------------------------------------------------------------------------
# Module wrapper
# ----------------------------------------------------------------------------
class StateToGraphPallas:
    def __init__(self, state_dim, node_feature_dim, num_nodes, key):
        self.num_nodes = num_nodes
        self.node_feature_dim = node_feature_dim
        hidden = num_nodes * node_feature_dim
        k_w, k_b = jax.random.split(key)
        bound = 1.0 / np.sqrt(state_dim)
        # fc1 weight stored as (state_dim, hidden) = PyTorch weight.T
        self.w = jax.random.uniform(k_w, (state_dim, hidden), jnp.float32,
                                    -bound, bound)
        self.b = jax.random.uniform(k_b, (1, hidden), jnp.float32,
                                    -bound, bound)

    def adjacency_to_edge_index(self, adj):
        # Compute edge counts + a padded, row-major-ordered edge list ON DEVICE;
        # only the per-batch counts force a host sync.
        B, N, _ = adj.shape
        mask = (adj != 0).reshape(B, N * N)
        counts = jnp.sum(mask, axis=-1)
        # Stable argsort pushes non-edges to the back while preserving the
        # row-major order among edges (matches torch boolean-mask ordering).
        order = jnp.argsort(jnp.logical_not(mask), axis=-1, stable=True)
        rows = (order // N).astype(jnp.int32)
        cols = (order % N).astype(jnp.int32)
        padded = jnp.stack([rows, cols], axis=1)          # (B, 2, N*N), on device
        counts_host = np.asarray(jax.device_get(counts))
        # TODO(synk): per-batch ragged edge lists need dynamic output shapes,
        # which Pallas/XLA cannot express; final split uses host-known counts.
        return tuple(padded[b, :, :int(counts_host[b])] for b in range(B))

    def forward(self, x, similarity_threshold, temperature, hard, key):
        B = x.shape[0]
        N, D = self.num_nodes, self.node_feature_dim
        # Standard Gumbel(0,1) noise (torch F.gumbel_softmax semantics), drawn
        # outside the kernel (pltpu PRNG has no interpreter lowering).
        g = jax.random.gumbel(key, (B, N * N), jnp.float32)
        emb_flat, adj_flat = state_to_graph_fused(
            x, self.w, self.b, g, N, D,
            similarity_threshold, temperature, hard)
        node_emb = emb_flat.reshape(B, N, D)
        adjacency = adj_flat.reshape(B, N, N)
        edge_index = self.adjacency_to_edge_index(adjacency)
        return node_emb, edge_index


# ----------------------------------------------------------------------------
if __name__ == "__main__":
    B, STATE_DIM, NUM_NODES, NODE_DIM = 2, 32, 8, 16

    root = jax.random.PRNGKey(0)
    k_params, k_x, k_gumbel = jax.random.split(root, 3)

    model = StateToGraphPallas(STATE_DIM, NODE_DIM, NUM_NODES, k_params)
    x = jax.random.normal(k_x, (B, STATE_DIM), jnp.float32)

    node_emb, edge_index = model.forward(
        x, similarity_threshold=0.5, temperature=1.0, hard=True, key=k_gumbel)

    jax.block_until_ready(node_emb)
    for e in edge_index:
        jax.block_until_ready(e)

    assert node_emb.shape == (B, NUM_NODES, NODE_DIM)
    assert len(edge_index) == B
    assert all(e.shape[0] == 2 for e in edge_index)
    print("KERNEL_OK")
</pallas_src>

<mosaic_0001>
module attributes {stable_mosaic.version = 11 : i64} {
  func.func @_state_to_graph_kernel(%arg0: i32, %arg1: memref<2x32xf32, #tpu.memory_space<vmem>>, %arg2: memref<32x128xf32, #tpu.memory_space<vmem>>, %arg3: memref<1x128xf32, #tpu.memory_space<vmem>>, %arg4: memref<2x64xf32, #tpu.memory_space<vmem>>, %arg5: memref<2x128xf32, #tpu.memory_space<vmem>>, %arg6: memref<2x64xf32, #tpu.memory_space<vmem>>) attributes {dimension_semantics = [#tpu.dimension_semantics<parallel>], iteration_bounds = array<i64: 1>, scalar_prefetch = 0 : i64, scratch_operands = 0 : i64, tpu.core_type = #tpu.core_type<tc>, window_params = [{transform_indices = @transform_0, window_bounds = array<i64: 2, 32>}, {pipeline_mode = #tpu.pipeline_mode<synchronous>, transform_indices = @transform_1, window_bounds = array<i64: 32, 128>}, {pipeline_mode = #tpu.pipeline_mode<synchronous>, transform_indices = @transform_2, window_bounds = array<i64: 1, 128>}, {transform_indices = @transform_3, window_bounds = array<i64: 2, 64>}, {transform_indices = @transform_4, window_bounds = array<i64: 2, 128>}, {transform_indices = @transform_5, window_bounds = array<i64: 2, 64>}]} {
    %c0 = arith.constant 0 : index
    %c0_0 = arith.constant 0 : index
    %0 = vector.load %arg1[%c0, %c0_0] : memref<2x32xf32, #tpu.memory_space<vmem>>, vector<2x32xf32>
    %c0_1 = arith.constant 0 : index
    %c0_2 = arith.constant 0 : index
    %1 = vector.load %arg2[%c0_1, %c0_2] : memref<32x128xf32, #tpu.memory_space<vmem>>, vector<32x128xf32>
    %2 = arith.truncf %0 : vector<2x32xf32> to vector<2x32xbf16>
    %3 = arith.truncf %1 : vector<32x128xf32> to vector<32x128xbf16>
    %cst = arith.constant dense<0.000000e+00> : vector<2x128xf32>
    %4 = tpu.matmul %2, %3, %cst {dimension_numbers = #tpu.dot_dimension_numbers<[1], [0], [0], [1], [0, 0, 1, 1], [], []>} : vector<2x32xbf16>, vector<32x128xbf16>, vector<2x128xf32> -> vector<2x128xf32>
    %c0_3 = arith.constant 0 : index
    %c0_4 = arith.constant 0 : index
    %5 = vector.load %arg3[%c0_3, %c0_4] : memref<1x128xf32, #tpu.memory_space<vmem>>, vector<1x128xf32>
    %6 = vector.broadcast %5 : vector<1x128xf32> to vector<2x128xf32>
    %7 = arith.addf %4, %6 : vector<2x128xf32>
    %cst_5 = arith.constant 0.000000e+00 : f32
    %8 = vector.broadcast %cst_5 : f32 to vector<2x128xf32>
    %9 = arith.maximumf %7, %8 : vector<2x128xf32>
    %c0_6 = arith.constant 0 : index
    %c0_7 = arith.constant 0 : index
    %10 = vector.load %arg5[%c0_6, %c0_7] : memref<2x128xf32, #tpu.memory_space<vmem>>, vector<2x128xf32>
    tpu.vector_store %arg5[%c0_6, %c0_7], %9 {strides = array<i32>} : memref<2x128xf32, #tpu.memory_space<vmem>>, vector<2x128xf32>,
    %11 = vector.shape_cast %9 : vector<2x128xf32> to vector<2x8x16xf32>
    %12 = arith.truncf %11 : vector<2x8x16xf32> to vector<2x8x16xbf16>
    "tpu.trace_start"() <{level = 10 : i32, message = "bnd,bmd->bnm"}> : () -> ()
    %cst_8 = arith.constant dense<0.000000e+00> : vector<2x8x8xf32>
    %13 = tpu.matmul %12, %12, %cst_8 {dimension_numbers = #tpu.dot_dimension_numbers<[2], [2], [1], [1], [0, 0, 0, 1, 1, 1], [0], [0]>} : vector<2x8x16xbf16>, vector<2x8x16xbf16>, vector<2x8x8xf32> -> vector<2x8x8xf32>
    "tpu.trace_stop"() : () -> ()
    %14 = arith.mulf %11, %11 : vector<2x8x16xf32>
    %cst_9 = arith.constant dense<0.000000e+00> : vector<2x8xf32>
    %15 = vector.multi_reduction <add>, %14, %cst_9 [2] : vector<2x8x16xf32> to vector<2x8xf32>
    %16 = math.sqrt %15 : vector<2x8xf32>
    %17 = vector.shape_cast %16 : vector<2x8xf32> to vector<2x8x1xf32>
    %18 = vector.shape_cast %16 : vector<2x8xf32> to vector<2x1x8xf32>
    %19 = vector.broadcast %17 : vector<2x8x1xf32> to vector<2x8x8xf32>
    %20 = vector.broadcast %18 : vector<2x1x8xf32> to vector<2x8x8xf32>
    %21 = arith.mulf %19, %20 : vector<2x8x8xf32>
    %cst_10 = arith.constant 9.99999993E-9 : f32
    %22 = vector.broadcast %cst_10 : f32 to vector<2x8x8xf32>
    %23 = arith.addf %21, %22 : vector<2x8x8xf32>
    %24 = arith.divf %13, %23 : vector<2x8x8xf32>
    %25 = arith.negf %24 : vector<2x8x8xf32>
    %26 = math.exp %25 : vector<2x8x8xf32>
    %cst_11 = arith.constant 1.000000e+00 : f32
    %27 = vector.broadcast %cst_11 : f32 to vector<2x8x8xf32>
    %28 = arith.addf %27, %26 : vector<2x8x8xf32>
    %29 = arith.divf %27, %28 : vector<2x8x8xf32>
    %cst_12 = arith.constant 5.000000e-01 : f32
    %30 = vector.broadcast %cst_12 : f32 to vector<2x8x8xf32>
    %31 = arith.subf %29, %30 : vector<2x8x8xf32>
    %c0_13 = arith.constant 0 : index
    %c0_14 = arith.constant 0 : index
    %32 = vector.load %arg4[%c0_13, %c0_14] : memref<2x64xf32, #tpu.memory_space<vmem>>, vector<2x64xf32>
    %33 = vector.shape_cast %32 : vector<2x64xf32> to vector<2x8x8xf32>
    %34 = arith.addf %31, %33 : vector<2x8x8xf32>
    %cst_15 = arith.constant 1.000000e+00 : f32
    %35 = vector.broadcast %cst_15 : f32 to vector<2x8x8xf32>
    %36 = arith.mulf %34, %35 : vector<2x8x8xf32>
    %cst_16 = arith.constant dense<0xFF800000> : vector<2x8xf32>
    %37 = vector.multi_reduction <maximumf>, %36, %cst_16 [2] : vector<2x8x8xf32> to vector<2x8xf32>
    %38 = vector.shape_cast %37 : vector<2x8xf32> to vector<2x8x1xf32>
    %39 = vector.broadcast %38 : vector<2x8x1xf32> to vector<2x8x8xf32>
    %40 = arith.subf %36, %39 : vector<2x8x8xf32>
    %41 = math.exp %40 : vector<2x8x8xf32>
    %cst_17 = arith.constant dense<0.000000e+00> : vector<2x8xf32>
    %42 = vector.multi_reduction <add>, %41, %cst_17 [2] : vector<2x8x8xf32> to vector<2x8xf32>
    %43 = vector.shape_cast %42 : vector<2x8xf32> to vector<2x8x1xf32>
    %44 = vector.broadcast %43 : vector<2x8x1xf32> to vector<2x8x8xf32>
    %45 = arith.divf %41, %44 : vector<2x8x8xf32>
    %46 = tpu.iota {dimensions = array<i32: 2>} : vector<2x8x8xi32>
    %cst_18 = arith.constant dense<0xFF800000> : vector<2x8xf32>
    %47 = vector.multi_reduction <maximumf>, %45, %cst_18 [2] : vector<2x8x8xf32> to vector<2x8xf32>
    %48 = vector.shape_cast %47 : vector<2x8xf32> to vector<2x8x1xf32>
    %49 = vector.broadcast %48 : vector<2x8x1xf32> to vector<2x8x8xf32>
    %50 = arith.cmpf oge, %45, %49 : vector<2x8x8xf32>
    %c8_i32 = arith.constant 8 : i32
    %51 = vector.broadcast %c8_i32 : i32 to vector<2x8x8xi32>
    %52 = arith.select %50, %46, %51 : vector<2x8x8xi1>, vector<2x8x8xi32>
    %cst_19 = arith.constant dense<2147483647> : vector<2x8xi32>
    %53 = vector.multi_reduction <minsi>, %52, %cst_19 [2] : vector<2x8x8xi32> to vector<2x8xi32>
    %54 = vector.shape_cast %53 : vector<2x8xi32> to vector<2x8x1xi32>
    %55 = vector.broadcast %54 : vector<2x8x1xi32> to vector<2x8x8xi32>
    %56 = arith.cmpi eq, %46, %55 : vector<2x8x8xi32>
    %cst_20 = arith.constant 1.000000e+00 : f32
    %cst_21 = arith.constant 0.000000e+00 : f32
    %57 = vector.broadcast %cst_20 : f32 to vector<2x8x8xf32>
    %58 = vector.broadcast %cst_21 : f32 to vector<2x8x8xf32>
    %59 = arith.select %56, %57, %58 : vector<2x8x8xi1>, vector<2x8x8xf32>
    %60 = tpu.iota {dimensions = array<i32: 1>} : vector<2x8x8xi32>
    %61 = arith.cmpi eq, %60, %46 : vector<2x8x8xi32>
    %cst_22 = arith.constant 0.000000e+00 : f32
    %62 = vector.broadcast %cst_22 : f32 to vector<2x8x8xf32>
    %63 = arith.select %61, %62, %59 : vector<2x8x8xi1>, vector<2x8x8xf32>
    %64 = vector.shape_cast %63 : vector<2x8x8xf32> to vector<2x64xf32>
    %c0_23 = arith.constant 0 : index
    %c0_24 = arith.constant 0 : index
    %65 = vector.load %arg6[%c0_23, %c0_24] : memref<2x64xf32, #tpu.memory_space<vmem>>, vector<2x64xf32>
    tpu.vector_store %arg6[%c0_23, %c0_24], %64 {strides = array<i32>} : memref<2x64xf32, #tpu.memory_space<vmem>>, vector<2x64xf32>,
    return
  }
  func.func @transform_0(%arg0: i32) -> (i32, i32) {
    %c0_i32 = arith.constant 0 : i32
    %c0_i32_0 = arith.constant 0 : i32
    return %arg0, %c0_i32 : i32, i32
  }
  func.func @transform_1(%arg0: i32) -> (i32, i32) {
    %c0_i32 = arith.constant 0 : i32
    %c0_i32_0 = arith.constant 0 : i32
    %c0_i32_1 = arith.constant 0 : i32
    return %c0_i32, %c0_i32_0 : i32, i32
  }
  func.func @transform_2(%arg0: i32) -> (i32, i32) {
    %c0_i32 = arith.constant 0 : i32
    %c0_i32_0 = arith.constant 0 : i32
    %c0_i32_1 = arith.constant 0 : i32
    return %c0_i32, %c0_i32_0 : i32, i32
  }
  func.func @transform_3(%arg0: i32) -> (i32, i32) {
    %c0_i32 = arith.constant 0 : i32
    %c0_i32_0 = arith.constant 0 : i32
    return %arg0, %c0_i32 : i32, i32
  }
  func.func @transform_4(%arg0: i32) -> (i32, i32) {
    %c0_i32 = arith.constant 0 : i32
    %c0_i32_0 = arith.constant 0 : i32
    return %arg0, %c0_i32 : i32, i32
  }
  func.func @transform_5(%arg0: i32) -> (i32, i32) {
    %c0_i32 = arith.constant 0 : i32
    %c0_i32_0 = arith.constant 0 : i32
    return %arg0, %c0_i32 : i32, i32
  }
}

</mosaic_0001>

<llo_original>
// kernel: tpu_custom_call.1
$region0: #{tpu_custom_call.1}
  #allocation0 [shape = 'u32[]', space=smem, size = 0x4, offset = 0x4, fixed_abs, tag = 'smem constant byte address 0x4 - core index']
  #allocation1 [shape = 'u32[144,128]{1,0:T(1,128)}', space=vmem, size = 0x12000, scoped, tag = 'internal scratch']
  %s0 = inlined_call_operand.hbm [shape: f32[2,32], index: 0, kind: input, shape index: {}]
  %s1 = inlined_call_operand.hbm [shape: f32[32,128], index: 1, kind: input, shape index: {}]
  %s2 = inlined_call_operand.vmem [shape: f32[1,128], index: 2, kind: input, shape index: {}]
  %s3 = inlined_call_operand.vmem [shape: f32[2,64], index: 3, kind: input, shape index: {}]
  %s4 = inlined_call_operand.hbm [shape: f32[2,128], index: 4, kind: output, shape index: {0}]
  %s5 = inlined_call_operand.hbm [shape: f32[2,64], index: 5, kind: output, shape index: {1}]
  %6 = xla_tuple %s4, %s5
  %s7 = sld [smem:[#allocation0]]
  $region42: #{tpu_custom_call.1} parent=0
    _
  %s9 = ssub.s32 1, %s7
  %s10 = scalar_select 0, %s9, %s7
  $region1: #{tpu_custom_call.1} parent=0
    #allocation2 [shape = 'u8[1024]{0}', space=vmem, size = 0x400, scoped, tag = 'input window, operand 0, single buffered']
    #allocation3 [shape = 's32[1]{0}', space=sflag, size = 0x4, scoped, tag = 'scoped memory for tpu_custom_call.1']
    #allocation4 [shape = 's32[1]{0}', space=sflag, size = 0x4, scoped, tag = 'scoped memory for tpu_custom_call.1']
    #allocation5 [shape = 'u8[16384]{0}', space=vmem, size = 0x4000, scoped, tag = 'input window, operand 1, single buffered']
    #allocation6 [shape = 's32[1]{0}', space=sflag, size = 0x4, scoped, tag = 'scoped memory for tpu_custom_call.1']
    #allocation7 [shape = 'u8[1024]{0}', space=vmem, size = 0x400, scoped, tag = 'output window, operand 0, single buffered']
    #allocation8 [shape = 'u8[1024]{0}', space=vmem, size = 0x400, scoped, tag = 'output window, operand 1, single buffered']
    #allocation9 [shape = 's32[1]{0}', space=sflag, size = 0x4, scoped, tag = 'scoped memory for tpu_custom_call.1']
    %11 = vsyncpa [#allocation3], 0
    %12 = vsyncpa [#allocation6], 0
    %13 = vsyncpa [#allocation4], 0
    %14 = vsyncpa [#allocation9], 0
    // Predicated region
    $region2: #{tpu_custom_call.1} parent=1 // pred_check
      _
    $region3: #{tpu_custom_call.1} parent=1 // pred_check_branch
      %16 = sbr.rel (0) target = $region5
    $region4: #{tpu_custom_call.1} parent=1 // pred_region
      %s18 = ssub.s32 32, 32
      %19 = vsyncadd [#allocation3], %s18
      %s21 = sshll.u32 [#allocation2], 4
      %s22 = int_to_ptr.vmem [resolvable:$true] %s21
      %24 = dma.hbm_to_vmem [thread:$0]  %s0, 32, %s22, [#allocation3]
    $region5: #{tpu_custom_call.1} parent=1 // pred_fallthru
      _
    // Predicated region
    $region6: #{tpu_custom_call.1} parent=1 // pred_check
      _
    $region7: #{tpu_custom_call.1} parent=1 // pred_check_branch
      %26 = sbr.rel (0) target = $region9
    $region8: #{tpu_custom_call.1} parent=1 // pred_region
      %s28 = ssub.s32 512, 512
      %29 = vsyncadd [#allocation6], %s28
      %s30 = sshll.u32 [#allocation5], 4
      %s31 = int_to_ptr.vmem [resolvable:$true] %s30
      %36 = dma.hbm_to_vmem [thread:$0]  %s1, 512, %s31, [#allocation6], 128, 128, 8
    $region9: #{tpu_custom_call.1} parent=1 // pred_fallthru
      _
    // Predicated region
    $region10: #{tpu_custom_call.1} parent=1 // pred_check
      _
    $region11: #{tpu_custom_call.1} parent=1 // pred_check_branch
      %38 = sbr.rel (0) target = $region13
    $region12: #{tpu_custom_call.1} parent=1 // pred_region
      _
    $region13: #{tpu_custom_call.1} parent=1 // pred_fallthru
      _
    // Predicated region
    $region14: #{tpu_custom_call.1} parent=1 // pred_check
      _
    $region15: #{tpu_custom_call.1} parent=1 // pred_check_branch
      %40 = sbr.rel (0) target = $region17
    $region16: #{tpu_custom_call.1} parent=1 // pred_region
      _
    $region17: #{tpu_custom_call.1} parent=1 // pred_fallthru
      _
    // Predicated region
    $region18: #{tpu_custom_call.1} parent=1 // pred_check
      _
    $region19: #{tpu_custom_call.1} parent=1 // pred_check_branch
      %42 = sbr.rel (0) target = $region21
    $region20: #{tpu_custom_call.1} parent=1 // pred_region
      %43 = dma.done [#allocation3], 32
    $region21: #{tpu_custom_call.1} parent=1 // pred_fallthru
      _
    // Predicated region
    $region22: #{tpu_custom_call.1} parent=1 // pred_check
      _
    $region23: #{tpu_custom_call.1} parent=1 // pred_check_branch
      %45 = sbr.rel (0) target = $region25
    $region24: #{tpu_custom_call.1} parent=1 // pred_region
      %46 = dma.done [#allocation6], 512
    $region25: #{tpu_custom_call.1} parent=1 // pred_fallthru
      _
    %v48 = vld [vmem:[#allocation2] sm:$0x3]
    %v49 = vld [vmem:[#allocation5] sm:$0xff]
    %v50 = vld [vmem:[#allocation5 + $0x8] sm:$0xff]
    %v51 = vld [vmem:[#allocation5 + $0x10] sm:$0xff]
    %v52 = vld [vmem:[#allocation5 + $0x18] sm:$0xff]
    %v53 = vpack.c.bf16 %v48, %v48
    %v54 = vpack.c.bf16 %v50, %v49
    %v55 = vpack.c.bf16 %v52, %v51
    %v56 = vld [vmem:[%s2] sm:$0x1]
    %v58 = vlaneseq
    %v59 = vshrl.u32 %v58, 7
    %v60 = vsub.s32 0, %v59
    %v61 = vrot.slane %v56, %v60
    %vm63 = vcmask 261120
    %v65 = vsel %vm63, %v53, 0
    %67 = vmatprep.subr.bf16.mxu0 0
    %68 = vmatpush1.bf16.msra.mxu0 %v54
    %69 = vmatprep.subr.bf16.mxu0 0
    %70 = vmatpush1.bf16.msra.mxu0 %v55
    %71 = vmatprep.subr.bf16.mxu0 0
    %72 = vmatpush1.bf16.msra.mxu0 0
    %73 = vmatprep.subr.bf16.mxu0 0
    %74 = vmatpush1.bf16.msra.mxu0 0
    %75 = vmatprep.subr.bf16.mxu0 0
    %76 = vmatpush1.bf16.msra.mxu0 0
    %77 = vmatprep.subr.bf16.mxu0 0
    %78 = vmatpush1.bf16.msra.mxu0 0
    %79 = vmatprep.subr.bf16.mxu0 0
    %80 = vmatpush1.bf16.msra.mxu0 0
    %81 = vmatprep.subr.bf16.mxu0 0
    %82 = vmatpush1.bf16.msra.mxu0 0
    %83 = vmatprep.subr.bf16.mxu0 0
    %84 = vmatpush1.bf16.msra.mxu0 0
    %85 = vmatprep.subr.bf16.mxu0 0
    %86 = vmatpush1.bf16.msra.mxu0 0
    %87 = vmatprep.subr.bf16.mxu0 0
    %88 = vmatpush1.bf16.msra.mxu0 0
    %89 = vmatprep.subr.bf16.mxu0 0
    %90 = vmatpush1.bf16.msra.mxu0 0
    %91 = vmatprep.subr.bf16.mxu0 0
    %92 = vmatpush1.bf16.msra.mxu0 0
    %93 = vmatprep.subr.bf16.mxu0 0
    %94 = vmatpush1.bf16.msra.mxu0 0
    %95 = vmatprep.subr.bf16.mxu0 0
    %96 = vmatpush1.bf16.msra.mxu0 0
    %97 = vmatprep.subr.bf16.mxu0 0
    %98 = vmatpush1.bf16.msra.mxu0 0
    %99 = vmatprep.mubr.bf16.mxu0 0
    %100 = vmatmul.mubr.bf16.gmra.mrb[0].mxu0 %v65
    %v101 = vpop.f32.mrb[0].mxu0
    %v102 = vadd.f32 %v61, %v101
    %v103 = vpop.f32.mrb[0].mxu0
    %v104 = vpop.f32.mrb[0].mxu0
    %v105 = vpop.f32.mrb[0].mxu0
    %106 = vdwg.mxu0
    %v107 = vmax.f32 %v102, 0.0
    %108 = vst [vmem:[#allocation7] sm:$0x3] %v107
    %110 = vrot.lane.b32.xlu0 %v107, 112
    %v111 = vpop.permute.xlu0 %110
    %113 = vrot.lane.b32.xlu0 %v107, 96
    %v114 = vpop.permute.xlu0 %113
    %116 = vrot.lane.b32.xlu0 %v107, 80
    %v117 = vpop.permute.xlu0 %116
    %119 = vrot.lane.b32.xlu0 %v107, 64
    %v120 = vpop.permute.xlu0 %119
    %122 = vrot.lane.b32.xlu0 %v107, 48
    %v123 = vpop.permute.xlu0 %122
    %125 = vrot.lane.b32.xlu0 %v107, 32
    %v126 = vpop.permute.xlu0 %125
    %128 = vrot.lane.b32.xlu0 %v107, 16
    %v129 = vpop.permute.xlu0 %128
    %v131 = vcombine.low %v107, %v114
    %v133 = vunpack.c.l.s4 1983009808
    %v134 = vunpack.c.0.s8 %v133
    %v135 = vlaneseq
    %v136 = vshrl.u32 %v135, 7
    %v137 = vsub.s32 %v134, %v136
    %v138 = vrot.slane %v131, %v137
    %v139 = vcombine.low %v111, %v117
    %v141 = vunpack.c.l.s4 1983009808
    %v142 = vunpack.c.0.s8 %v141
    %v143 = vlaneseq
    %v144 = vshrl.u32 %v143, 7
    %v145 = vsub.s32 %v142, %v144
    %v146 = vrot.slane %v139, %v145
    %v147 = vcombine.low %v120, %v126
    %v149 = vunpack.c.l.s4 1983009808
    %v150 = vunpack.c.0.s8 %v149
    %v151 = vlaneseq
    %v152 = vshrl.u32 %v151, 7
    %v153 = vsub.s32 %v150, %v152
    %v154 = vrot.slane %v147, %v153
    %v155 = vcombine.low %v123, %v129
    %v157 = vunpack.c.l.s4 1983009808
    %v158 = vunpack.c.0.s8 %v157
    %v159 = vlaneseq
    %v160 = vshrl.u32 %v159, 7
    %v161 = vsub.s32 %v158, %v160
    %v162 = vrot.slane %v155, %v161
    %v163 = vcombine.low %v138, %v146
    %v165 = vunpack.c.l.s4 1934713408
    %v166 = vunpack.c.0.s8 %v165
    %v167 = vlaneseq
    %v168 = vshrl.u32 %v167, 7
    %v169 = vsub.s32 %v166, %v168
    %v170 = vrot.slane %v163, %v169
    %v171 = vcombine.low %v154, %v162
    %v173 = vunpack.c.l.s4 1934713408
    %v174 = vunpack.c.0.s8 %v173
    %v175 = vlaneseq
    %v176 = vshrl.u32 %v175, 7
    %v177 = vsub.s32 %v174, %v176
    %v178 = vrot.slane %v171, %v177
    %v179 = vcombine.low %v170, %v178
    %v180 = vcombine.high %v170, %v178
    %v181 = vpack.c.bf16 %v179, %v179
    %v182 = vpack.c.bf16 %v180, %v180
    %vm183 = vcmask 130048
    %v185 = vsel %vm183, %v181, 0
    %187 = vmatprep.subr.bf16.mxu0 0
    %188 = vmatpush1.bf16.xpose.msra.mxu0 %v185
    %189 = vmatprep.subr.bf16.mxu0 0
    %190 = vmatpush1.bf16.xpose.msra.mxu0 0
    %191 = vmatprep.subr.bf16.mxu0 0
    %192 = vmatpush1.bf16.xpose.msra.mxu0 0
    %193 = vmatprep.subr.bf16.mxu0 0
    %194 = vmatpush1.bf16.xpose.msra.mxu0 0
    %195 = vmatprep.subr.bf16.mxu0 0
    %196 = vmatpush1.bf16.xpose.msra.mxu0 0
    %197 = vmatprep.subr.bf16.mxu0 0
    %198 = vmatpush1.bf16.xpose.msra.mxu0 0
    %199 = vmatprep.subr.bf16.mxu0 0
    %200 = vmatpush1.bf16.xpose.msra.mxu0 0
    %201 = vmatprep.subr.bf16.mxu0 0
    %202 = vmatpush1.bf16.xpose.msra.mxu0 0
    %203 = vmatprep.subr.bf16.mxu0 0
    %204 = vmatpush1.bf16.xpose.msra.mxu0 0
    %205 = vmatprep.subr.bf16.mxu0 0
    %206 = vmatpush1.bf16.xpose.msra.mxu0 0
    %207 = vmatprep.subr.bf16.mxu0 0
    %208 = vmatpush1.bf16.xpose.msra.mxu0 0
    %209 = vmatprep.subr.bf16.mxu0 0
    %210 = vmatpush1.bf16.xpose.msra.mxu0 0
    %211 = vmatprep.subr.bf16.mxu0 0
    %212 = vmatpush1.bf16.xpose.msra.mxu0 0
    %213 = vmatprep.subr.bf16.mxu0 0
    %214 = vmatpush1.bf16.xpose.msra.mxu0 0
    %215 = vmatprep.subr.bf16.mxu0 0
    %216 = vmatpush1.bf16.xpose.msra.mxu0 0
    %217 = vmatprep.subr.bf16.mxu0 0
    %218 = vmatpush1.bf16.xpose.msra.mxu0 0
    %219 = vmatprep.mubr.bf16.mxu0 0
    %220 = vmatmul.mubr.bf16.gmra.mrb[0].mxu0 %v185
    %v221 = vpop.f32.mrb[0].mxu0
    %v222 = vadd.f32 0.0, %v221
    %v223 = vpop.f32.mrb[0].mxu0
    %v224 = vpop.f32.mrb[0].mxu0
    %v225 = vpop.f32.mrb[0].mxu0
    %226 = vdwg.mxu0
    %v228 = vsel %vm183, %v182, 0
    %230 = vmatprep.subr.bf16.mxu0 0
    %231 = vmatpush1.bf16.xpose.msra.mxu0 %v228
    %232 = vmatprep.subr.bf16.mxu0 0
    %233 = vmatpush1.bf16.xpose.msra.mxu0 0
    %234 = vmatprep.subr.bf16.mxu0 0
    %235 = vmatpush1.bf16.xpose.msra.mxu0 0
    %236 = vmatprep.subr.bf16.mxu0 0
    %237 = vmatpush1.bf16.xpose.msra.mxu0 0
    %238 = vmatprep.subr.bf16.mxu0 0
    %239 = vmatpush1.bf16.xpose.msra.mxu0 0
    %240 = vmatprep.subr.bf16.mxu0 0
    %241 = vmatpush1.bf16.xpose.msra.mxu0 0
    %242 = vmatprep.subr.bf16.mxu0 0
    %243 = vmatpush1.bf16.xpose.msra.mxu0 0
    %244 = vmatprep.subr.bf16.mxu0 0
    %245 = vmatpush1.bf16.xpose.msra.mxu0 0
    %246 = vmatprep.subr.bf16.mxu0 0
    %247 = vmatpush1.bf16.xpose.msra.mxu0 0
    %248 = vmatprep.subr.bf16.mxu0 0
    %249 = vmatpush1.bf16.xpose.msra.mxu0 0
    %250 = vmatprep.subr.bf16.mxu0 0
    %251 = vmatpush1.bf16.xpose.msra.mxu0 0
    %252 = vmatprep.subr.bf16.mxu0 0
    %253 = vmatpush1.bf16.xpose.msra.mxu0 0
    %254 = vmatprep.subr.bf16.mxu0 0
    %255 = vmatpush1.bf16.xpose.msra.mxu0 0
    %256 = vmatprep.subr.bf16.mxu0 0
    %257 = vmatpush1.bf16.xpose.msra.mxu0 0
    %258 = vmatprep.subr.bf16.mxu0 0
    %259 = vmatpush1.bf16.xpose.msra.mxu0 0
    %260 = vmatprep.subr.bf16.mxu0 0
    %261 = vmatpush1.bf16.xpose.msra.mxu0 0
    %262 = vmatprep.mubr.bf16.mxu0 0
    %263 = vmatmul.mubr.bf16.gmra.mrb[0].mxu0 %v228
    %v264 = vpop.f32.mrb[0].mxu0
    %v265 = vadd.f32 0.0, %v264
    %v266 = vpop.f32.mrb[0].mxu0
    %v267 = vpop.f32.mrb[0].mxu0
    %v268 = vpop.f32.mrb[0].mxu0
    %269 = vdwg.mxu0
    %v270 = vmul.f32 %v179, %v179
    %v271 = vmul.f32 %v180, %v180
    %v272 = vsel %vm183, %v270, 0.0
    %273 = vadd.xlane.f32.xlu0 %v272
    %v274 = vpop.xlane.xlu0 %273
    %v275 = vsel %vm183, %v271, 0.0
    %276 = vadd.xlane.f32.xlu0 %v275
    %v277 = vpop.xlane.xlu0 %276
    %v278 = vrsqrt.pop %v274
    %v279 = vmul.f32 %v274, %v278
    %vm280 = vcmp.eq.f32.partialorder %v274, inf
    %v281 = vsel %vm280, %v274, %v279
    %vm282 = vcmp.eq.f32.partialorder %v274, 0.0
    %v283 = vand.u32 %v274, 2147483648
    %v284 = vsel %vm282, %v283, %v281
    %v285 = vrsqrt.pop %v277
    %v286 = vmul.f32 %v277, %v285
    %vm287 = vcmp.eq.f32.partialorder %v277, inf
    %v288 = vsel %vm287, %v277, %v286
    %vm289 = vcmp.eq.f32.partialorder %v277, 0.0
    %v290 = vand.u32 %v277, 2147483648
    %v291 = vsel %vm289, %v290, %v288
    %v294 = vlaneseq
    %v295 = vand.u32 %v294, 127
    %v296 = vlaneseq
    %v297 = vshrl.u32 %v296, 7
    %v298 = vsub.s32 %v295, %v297
    %v299 = vrot.slane %v284, %v298
    %v300 = vlaneseq
    %v301 = vshrl.u32 %v300, 7
    %v302 = vsub.s32 %v295, %v301
    %v303 = vrot.slane %v291, %v302
    %vm304 = vcmask 1042434
    %v305 = vsel %vm304, %v299, %v299
    %vm306 = vcmask 1043459
    %v307 = vsel %vm306, %v299, %v305
    %vm308 = vcmask 1044484
    %v309 = vsel %vm308, %v299, %v307
    %vm310 = vcmask 1045509
    %v311 = vsel %vm310, %v299, %v309
    %vm312 = vcmask 1046534
    %v313 = vsel %vm312, %v299, %v311
    %vm314 = vcmask 1047559
    %v315 = vsel %vm314, %v299, %v313
    %v316 = vsel %vm304, %v303, %v303
    %v317 = vsel %vm306, %v303, %v316
    %v318 = vsel %vm308, %v303, %v317
    %v319 = vsel %vm310, %v303, %v318
    %v320 = vsel %vm312, %v303, %v319
    %v321 = vsel %vm314, %v303, %v320
    %v324 = vmul.f32 %v284, %v315
    %v325 = vmul.f32 %v291, %v321
    %v326 = vadd.f32 %v324, 1e-08
    %v327 = vadd.f32 %v325, 1e-08
    %v328 = vrcp.pop %v326
    %v329 = vmul.f32 %v222, %v328
    %v330 = vrcp.pop %v327
    %v331 = vmul.f32 %v265, %v330
    %v332 = vxor.u32 %v329, 2147483648
    %v333 = vxor.u32 %v331, 2147483648
    %v334 = vmul.f32 %v332, 1.442695
    %v335 = vpow.pop %v334
    %v336 = vmul.f32 %v333, 1.442695
    %v337 = vpow.pop %v336
    %v338 = vadd.f32 %v335, 1.0
    %v339 = vadd.f32 %v337, 1.0
    %v340 = vrcp.pop %v338
    %v341 = vmul.f32 1.0, %v340
    %v342 = vrcp.pop %v339
    %v343 = vmul.f32 1.0, %v342
    %v344 = vsub.f32 %v341, 0.5
    %v345 = vsub.f32 %v343, 0.5
    %v346 = vld [vmem:[%s3] sm:$0x3]
    %348 = vrot.lane.b32.xlu0 %v346, 120
    %v349 = vpop.permute.xlu0 %348
    %351 = vrot.lane.b32.xlu0 %v346, 112
    %v352 = vpop.permute.xlu0 %351
    %354 = vrot.lane.b32.xlu0 %v346, 104
    %v355 = vpop.permute.xlu0 %354
    %357 = vrot.lane.b32.xlu0 %v346, 96
    %v358 = vpop.permute.xlu0 %357
    %360 = vrot.lane.b32.xlu0 %v346, 88
    %v361 = vpop.permute.xlu0 %360
    %363 = vrot.lane.b32.xlu0 %v346, 80
    %v364 = vpop.permute.xlu0 %363
    %366 = vrot.lane.b32.xlu0 %v346, 72
    %v367 = vpop.permute.xlu0 %366
    %v369 = vcombine.low %v346, %v352
    %v371 = vunpack.c.l.s4 1983009808
    %v372 = vunpack.c.0.s8 %v371
    %v373 = vlaneseq
    %v374 = vshrl.u32 %v373, 7
    %v375 = vsub.s32 %v372, %v374
    %v376 = vrot.slane %v369, %v375
    %v377 = vcombine.low %v349, %v355
    %v379 = vunpack.c.l.s4 1983009808
    %v380 = vunpack.c.0.s8 %v379
    %v381 = vlaneseq
    %v382 = vshrl.u32 %v381, 7
    %v383 = vsub.s32 %v380, %v382
    %v384 = vrot.slane %v377, %v383
    %v385 = vcombine.low %v358, %v364
    %v387 = vunpack.c.l.s4 1983009808
    %v388 = vunpack.c.0.s8 %v387
    %v389 = vlaneseq
    %v390 = vshrl.u32 %v389, 7
    %v391 = vsub.s32 %v388, %v390
    %v392 = vrot.slane %v385, %v391
    %v393 = vcombine.low %v361, %v367
    %v395 = vunpack.c.l.s4 1983009808
    %v396 = vunpack.c.0.s8 %v395
    %v397 = vlaneseq
    %v398 = vshrl.u32 %v397, 7
    %v399 = vsub.s32 %v396, %v398
    %v400 = vrot.slane %v393, %v399
    %v401 = vcombine.low %v376, %v384
    %v403 = vunpack.c.l.s4 1934713408
    %v404 = vunpack.c.0.s8 %v403
    %v405 = vlaneseq
    %v406 = vshrl.u32 %v405, 7
    %v407 = vsub.s32 %v404, %v406
    %v408 = vrot.slane %v401, %v407
    %v409 = vcombine.low %v392, %v400
    %v411 = vunpack.c.l.s4 1934713408
    %v412 = vunpack.c.0.s8 %v411
    %v413 = vlaneseq
    %v414 = vshrl.u32 %v413, 7
    %v415 = vsub.s32 %v412, %v414
    %v416 = vrot.slane %v409, %v415
    %v417 = vcombine.low %v408, %v416
    %v418 = vcombine.high %v408, %v416
    %v419 = vadd.f32 %v344, %v417
    %v420 = vadd.f32 %v345, %v418
    %vm421 = vcmask 64512
    %v422 = vsel %vm421, %v419, -inf
    %423 = vmax.xlane.f32.xlu0 %v422
    %v424 = vpop.xlane.xlu0 %423
    %v425 = vsel %vm421, %v420, -inf
    %426 = vmax.xlane.f32.xlu0 %v425
    %v427 = vpop.xlane.xlu0 %426
    %v428 = vsub.f32 %v419, %v424
    %v429 = vsub.f32 %v420, %v427
    %v430 = vmul.f32 %v428, 1.442695
    %v431 = vpow.pop %v430
    %v432 = vmul.f32 %v429, 1.442695
    %v433 = vpow.pop %v432
    %v434 = vsel %vm421, %v431, 0.0
    %435 = vadd.xlane.f32.xlu0 %v434
    %v436 = vpop.xlane.xlu0 %435
    %v437 = vsel %vm421, %v433, 0.0
    %438 = vadd.xlane.f32.xlu0 %v437
    %v439 = vpop.xlane.xlu0 %438
    %v440 = vrcp.pop %v436
    %v441 = vmul.f32 %v431, %v440
    %v442 = vrcp.pop %v439
    %v443 = vmul.f32 %v433, %v442
    %v444 = vsel %vm421, %v441, -inf
    %445 = vmax.xlane.f32.xlu0 %v444
    %v446 = vpop.xlane.xlu0 %445
    %v447 = vsel %vm421, %v443, -inf
    %448 = vmax.xlane.f32.xlu0 %v447
    %v449 = vpop.xlane.xlu0 %448
    %vm450 = vcmp.ge.f32.partialorder %v441, %v446
    %vm451 = vcmp.ge.f32.partialorder %v443, %v449
    %v452 = vsel %vm450, %v295, 8
    %v453 = vsel %vm451, %v295, 8
    %v454 = vsel %vm421, %v452, 2147483647
    %v455 = vand.u32 %v454, 65535
    %v456 = vshra.s32 %v454, 16
    %v457 = vcvt.s32.f32 %v455
    %v458 = vcvt.s32.f32 %v456
    %459 = vmin.xlane.f32.xlu0 %v458
    %v460 = vpop.xlane.xlu0 %459
    %vm461 = vcmp.eq.f32.partialorder %v458, %v460
    %v462 = vsel %vm461, %v457, inf
    %463 = vmin.xlane.f32.xlu0 %v462
    %v464 = vpop.xlane.xlu0 %463
    %v465 = vcvt.f32.s32 %v464
    %v466 = vcvt.f32.s32 %v460
    %v467 = vshll.u32 %v466, 16
    %v468 = vadd.s32 %v467, %v465
    %v469 = vsel %vm421, %v453, 2147483647
    %v470 = vand.u32 %v469, 65535
    %v471 = vshra.s32 %v469, 16
    %v472 = vcvt.s32.f32 %v470
    %v473 = vcvt.s32.f32 %v471
    %474 = vmin.xlane.f32.xlu0 %v473
    %v475 = vpop.xlane.xlu0 %474
    %vm476 = vcmp.eq.f32.partialorder %v473, %v475
    %v477 = vsel %vm476, %v472, inf
    %478 = vmin.xlane.f32.xlu0 %v477
    %v479 = vpop.xlane.xlu0 %478
    %v480 = vcvt.f32.s32 %v479
    %v481 = vcvt.f32.s32 %v475
    %v482 = vshll.u32 %v481, 16
    %v483 = vadd.s32 %v482, %v480
    %vm484 = vcmp.eq.s32.totalorder %v295, %v468
    %vm485 = vcmp.eq.s32.totalorder %v295, %v483
    %v486 = vsel %vm484, 1.0, 0.0
    %v487 = vsel %vm485, 1.0, 0.0
    %v488 = vlaneseq
    %v489 = vshrl.u32 %v488, 7
    %vm490 = vcmp.eq.s32.totalorder %v489, %v295
    %v491 = vsel %vm490, 0.0, %v486
    %v492 = vsel %vm490, 0.0, %v487
    %v493 = vcombine.high %v491, 0.0
    %v495 = vunpack.c.l.s4 1983009808
    %v496 = vunpack.c.0.s8 %v495
    %v497 = vlaneseq
    %v498 = vshrl.u32 %v497, 7
    %v499 = vsub.s32 %v496, %v498
    %v500 = vrot.slane %v491, %v499
    %v502 = vunpack.c.l.s4 1983009808
    %v503 = vunpack.c.0.s8 %v502
    %v504 = vlaneseq
    %v505 = vshrl.u32 %v504, 7
    %v506 = vsub.s32 %v503, %v505
    %v507 = vrot.slane %v493, %v506
    %v508 = vcombine.high %v492, 0.0
    %v510 = vunpack.c.l.s4 1983009808
    %v511 = vunpack.c.0.s8 %v510
    %v512 = vlaneseq
    %v513 = vshrl.u32 %v512, 7
    %v514 = vsub.s32 %v511, %v513
    %v515 = vrot.slane %v492, %v514
    %v517 = vunpack.c.l.s4 1983009808
    %v518 = vunpack.c.0.s8 %v517
    %v519 = vlaneseq
    %v520 = vshrl.u32 %v519, 7
    %v521 = vsub.s32 %v518, %v520
    %v522 = vrot.slane %v508, %v521
    %v523 = vcombine.low %v500, %v515
    %v524 = vcombine.high %v500, %v515
    %v526 = vunpack.c.l.s4 1934713408
    %v527 = vunpack.c.0.s8 %v526
    %v528 = vlaneseq
    %v529 = vshrl.u32 %v528, 7
    %v530 = vsub.s32 %v527, %v529
    %v531 = vrot.slane %v523, %v530
    %v533 = vunpack.c.l.s4 1934713408
    %v534 = vunpack.c.0.s8 %v533
    %v535 = vlaneseq
    %v536 = vshrl.u32 %v535, 7
    %v537 = vsub.s32 %v534, %v536
    %v538 = vrot.slane %v524, %v537
    %v539 = vcombine.low %v507, %v522
    %v540 = vcombine.high %v507, %v522
    %v542 = vunpack.c.l.s4 1934713408
    %v543 = vunpack.c.0.s8 %v542
    %v544 = vlaneseq
    %v545 = vshrl.u32 %v544, 7
    %v546 = vsub.s32 %v543, %v545
    %v547 = vrot.slane %v539, %v546
    %v549 = vunpack.c.l.s4 1934713408
    %v550 = vunpack.c.0.s8 %v549
    %v551 = vlaneseq
    %v552 = vshrl.u32 %v551, 7
    %v553 = vsub.s32 %v550, %v552
    %v554 = vrot.slane %v540, %v553
    %v555 = vcombine.high %v531, 0.0
    %v556 = vcombine.high %v538, 0.0
    %v557 = vcombine.high %v547, 0.0
    %v558 = vcombine.high %v554, 0.0
    %560 = vrot.lane.b32.xlu0 %v555, 8
    %v561 = vpop.permute.xlu0 %560
    %564 = vrot.lane.b32.xlu0 %v538, 16
    %v565 = vpop.permute.xlu0 %564
    %568 = vrot.lane.b32.xlu0 %v556, 24
    %v569 = vpop.permute.xlu0 %568
    %572 = vrot.lane.b32.xlu0 %v547, 32
    %v573 = vpop.permute.xlu0 %572
    %576 = vrot.lane.b32.xlu0 %v557, 40
    %v577 = vpop.permute.xlu0 %576
    %580 = vrot.lane.b32.xlu0 %v554, 48
    %v581 = vpop.permute.xlu0 %580
    %584 = vrot.lane.b32.xlu0 %v558, 56
    %v585 = vpop.permute.xlu0 %584
    %v587 = vsel %vm421, %v531, %v561
    %v588 = vsel %vm183, %v587, %v565
    %vm589 = vcmask 195584
    %v590 = vsel %vm589, %v588, %v569
    %v591 = vsel %vm63, %v590, %v573
    %vm592 = vcmask 326656
    %v593 = vsel %vm592, %v591, %v577
    %vm594 = vcmask 392192
    %v595 = vsel %vm594, %v593, %v581
    %vm596 = vcmask 457728
    %v597 = vsel %vm596, %v595, %v585
    %vm598 = vcmask 517120
    %599 = vst.msk [vmem:[#allocation8] sm:$0x3] %vm598, %v597
    // Predicated region
    $region26: #{tpu_custom_call.1} parent=1 // pred_check
      _
    $region27: #{tpu_custom_call.1} parent=1 // pred_check_branch
      %601 = sbr.rel (0) target = $region29
    $region28: #{tpu_custom_call.1} parent=1 // pred_region
      %s603 = ssub.s32 32, 32
      %604 = vsyncadd [#allocation4], %s603
      %s606 = sshll.u32 [#allocation7], 4
      %s607 = int_to_ptr.vmem [resolvable:$true] %s606
      %609 = dma.vmem_to_hbm [thread:$0]  %s607, 32, %s4, [#allocation4]
    $region29: #{tpu_custom_call.1} parent=1 // pred_fallthru
      _
    // Predicated region
    $region30: #{tpu_custom_call.1} parent=1 // pred_check
      _
    $region31: #{tpu_custom_call.1} parent=1 // pred_check_branch
      %611 = sbr.rel (0) target = $region33
    $region32: #{tpu_custom_call.1} parent=1 // pred_region
      %s613 = ssub.s32 32, 32
      %614 = vsyncadd [#allocation9], %s613
      %s616 = sshll.u32 [#allocation8], 4
      %s617 = int_to_ptr.vmem [resolvable:$true] %s616
      %619 = dma.vmem_to_hbm [thread:$0]  %s617, 32, %s5, [#allocation9]
    $region33: #{tpu_custom_call.1} parent=1 // pred_fallthru
      _
    // Predicated region
    $region34: #{tpu_custom_call.1} parent=1 // pred_check
      _
    $region35: #{tpu_custom_call.1} parent=1 // pred_check_branch
      %621 = sbr.rel (0) target = $region37
    $region36: #{tpu_custom_call.1} parent=1 // pred_region
      %622 = dma.done [#allocation4], 32
    $region37: #{tpu_custom_call.1} parent=1 // pred_fallthru
      _
    // Predicated region
    $region38: #{tpu_custom_call.1} parent=1 // pred_check
      _
    $region39: #{tpu_custom_call.1} parent=1 // pred_check_branch
      %624 = sbr.rel (0) target = $region41
    $region40: #{tpu_custom_call.1} parent=1 // pred_region
      %625 = dma.done [#allocation9], 32
    $region41: #{tpu_custom_call.1} parent=1 // pred_fallthru
      _
    %626 = vsyncpa [#allocation3], 1
    %627 = vsyncpa [#allocation6], 1
    %628 = vsyncpa [#allocation4], 1
    %629 = vsyncpa [#allocation9], 1

</llo_original>
